<compile_context>
chip_gen: v6e
topology: v6e:2x2x1
jax: 0.10.0
libtpu: 0.0.40
codegen_flags: <defaults>
</compile_context>

<pallas_src>
import functools

import jax
import jax.numpy as jnp
from jax.experimental import pallas as pl
from jax.experimental.pallas import tpu as pltpu


def _rmsnorm_kernel(x_ref, w_ref, o_ref, *, eps):
    # x_ref: (row_tile, dim) input tile
    # w_ref: (1, dim) weight, already cast to the output dtype in the wrapper,
    #        resident across grid steps (constant index_map).
    # o_ref: (row_tile, dim) output tile
    x32 = x_ref[...].astype(jnp.float32)                      # x.float()
    ms = jnp.mean(x32 * x32, axis=-1, keepdims=True)          # mean(x^2, -1)
    normed = x32 * jax.lax.rsqrt(ms + eps)                    # x * rsqrt(. + eps)
    # .type_as(x) happens BEFORE the weight multiply (PyTorch semantics);
    # the multiply then promotes to the output dtype (like `output * weight`).
    normed = normed.astype(x_ref.dtype)
    o_ref[...] = (normed * w_ref[...]).astype(o_ref.dtype)


def _physical_vmem_bytes():
    """Physical VMEM of the current TPU; conservative 64 MiB (v7x/TC) fallback."""
    try:
        info = pltpu.get_tpu_info()
        v = getattr(info, "vmem_capacity_bytes", None)
        if v:
            return int(v)
    except Exception:
        pass
    return 64 << 20


def _sublane_rows(dtype):
    """Rows per sublane group: 8 for f32, 16 for bf16, 32 for int8/fp8."""
    itemsize = jnp.dtype(dtype).itemsize
    return 8 * max(1, 4 // itemsize)


# Per-element VMEM bytes for the pipelined working set:
#   2x double-buffered input + 2x double-buffered output + ~3 full-tile f32
#   temporaries (x32, normed f32, downcast) — single formula used by both the
#   tile picker and vmem_limit_bytes so they cannot disagree.
def _per_row_vmem_bytes(dim, in_dtype, out_dtype):
    in_b = jnp.dtype(in_dtype).itemsize
    out_b = jnp.dtype(out_dtype).itemsize
    return dim * (2 * in_b + 2 * out_b + 3 * 4)


_MIN_GRID_STEPS = 4  # >= 2 * num_tensorcores on v7x; keeps the pipeline fed.


def _pick_row_tile(rows, dim, in_dtype, out_dtype, vmem_bytes):
    sublane = _sublane_rows(in_dtype)
    # Budget fraction: 1/4 of 64 MiB/TC on v7x; v5e/v6e (128 MiB) can afford 3/8.
    if vmem_bytes >= (128 << 20):
        budget = (vmem_bytes * 3) // 8
    else:
        budget = vmem_bytes // 4
    per_row = max(1, _per_row_vmem_bytes(dim, in_dtype, out_dtype))
    tile = max(sublane, budget // per_row)

    if rows >= _MIN_GRID_STEPS * sublane:
        # Large enough problem: ensure >= _MIN_GRID_STEPS grid steps so the
        # software pipeline has a steady state and both v7x TCs get work.
        steps_tile = max(sublane, (rows // _MIN_GRID_STEPS // sublane) * sublane)
        tile = min(tile, steps_tile)
        return max(sublane, (tile // sublane) * sublane)

    # Small problem: take it as one whole tile when it fits (block dims equal
    # the full array dims, so no (8,128) divisibility issue and no raggedness).
    if rows <= tile:
        return rows
    # Tiny row count that still exceeds the VMEM budget (only for enormous dim).
    return max(sublane, (tile // sublane) * sublane)


def rmsnorm(x, weight, eps=1e-6, *, row_tile=None):
    """RMSNorm over the last axis of x; weight shape (dim,).

    Output dtype follows PyTorch promotion: result_type(x.dtype, weight.dtype).
    """
    orig_shape = x.shape
    dim = orig_shape[-1]
    rows = 1
    for s in orig_shape[:-1]:
        rows *= s

    # NOTE: dim % 128 != 0 lowers output stores to masked vst.msk (wasted
    # lanes).  Fine for correctness; pad hidden size at the model level for
    # real workloads.
    out_dtype = jnp.result_type(x.dtype, weight.dtype)

    x2d = x.reshape(rows, dim)
    # Cast the weight once here (not per grid step inside the kernel).
    w2d = weight.astype(out_dtype).reshape(1, dim)

    vmem_bytes = _physical_vmem_bytes()
    sublane = _sublane_rows(x.dtype)
    if row_tile is None:
        row_tile = _pick_row_tile(rows, dim, x.dtype, out_dtype, vmem_bytes)
    else:
        row_tile = int(row_tile)
        if row_tile >= rows:
            row_tile = rows
        else:
            row_tile = max(sublane, (row_tile // sublane) * sublane)

    # Ragged grid: no jnp.pad of x and no output slice.  Pallas clips the last
    # block's writes; its garbage OOB input rows are harmless because every
    # row is normalized independently (do NOT add cross-row reductions without
    # restoring explicit zero padding).
    grid = (pl.cdiv(rows, row_tile),)

    # Explicit scoped-VMEM limit so the tile fits past the default cap, while
    # staying inside physical VMEM (same formula as the tile picker).
    working = row_tile * _per_row_vmem_bytes(dim, x.dtype, out_dtype) \
        + dim * jnp.dtype(out_dtype).itemsize  # + resident weight block
    vmem_limit = int(min(vmem_bytes - (2 << 20),
                         max(working + (8 << 20), 32 << 20)))

    out2d = pl.pallas_call(
        functools.partial(_rmsnorm_kernel, eps=float(eps)),
        out_shape=jax.ShapeDtypeStruct((rows, dim), out_dtype),
        grid_spec=pltpu.PrefetchScalarGridSpec(
            num_scalar_prefetch=0,
            grid=grid,
            in_specs=[
                pl.BlockSpec((row_tile, dim), lambda i: (i, 0)),
                pl.BlockSpec((1, dim), lambda i: (0, 0)),
            ],
            out_specs=pl.BlockSpec((row_tile, dim), lambda i: (i, 0)),
        ),
        compiler_params=pltpu.CompilerParams(
            # Row axis is embarrassingly parallel -> shardable across
            # TensorCores (megacore / v7x dual-TC).
            dimension_semantics=("parallel",),
            vmem_limit_bytes=vmem_limit,
        ),
    )(x2d, w2d)

    return out2d.reshape(orig_shape[:-1] + (dim,))


def _reference(x, weight, eps):
    x32 = x.astype(jnp.float32)
    normed = x32 * jax.lax.rsqrt(
        jnp.mean(x32 * x32, axis=-1, keepdims=True) + eps)
    normed = normed.astype(x.dtype)
    return normed * weight          # promotes like PyTorch's `output * weight`


if __name__ == "__main__":
    eps = 1e-6
    key = jax.random.PRNGKey(0)
    k1, k2, k3, k4, k5, k6 = jax.random.split(key, 6)

    # --- Case 1: f32, small (batch, seq, hidden) consistent with the module.
    batch, seq, hidden = 2, 8, 32
    x = jax.random.normal(k1, (batch, seq, hidden), dtype=jnp.float32)
    weight = jnp.ones((hidden,), dtype=jnp.float32)   # nn.Parameter(torch.ones(dim))
    out = jax.block_until_ready(rmsnorm(x, weight, eps=eps))
    ref = _reference(x, weight, eps)
    assert out.shape == x.shape and out.dtype == jnp.float32
    assert jnp.allclose(out, ref, atol=1e-5, rtol=1e-5)

    # --- Case 2: bf16 x with bf16 weight (common llama path: weight cast in
    #     the wrapper, lane-dense dim=256, rows do not hit sublane multiple).
    xb = jax.random.normal(k2, (2, 15, 256), dtype=jnp.float32).astype(jnp.bfloat16)
    wb = (1.0 + 0.1 * jax.random.normal(k3, (256,), dtype=jnp.float32)).astype(jnp.bfloat16)
    outb = jax.block_until_ready(rmsnorm(xb, wb, eps=eps))
    refb = _reference(xb, wb, eps)
    assert outb.shape == xb.shape and outb.dtype == jnp.bfloat16
    assert jnp.allclose(outb.astype(jnp.float32), refb.astype(jnp.float32),
                        atol=2e-2, rtol=2e-2)

    # --- Case 3: f32, rows = 100 with dim = 128 -> multi-step grid whose last
    #     block is ragged (exercises the no-pad / clipped-write path).
    xc = jax.random.normal(k4, (4, 25, 128), dtype=jnp.float32)
    wc = 1.0 + 0.1 * jax.random.normal(k5, (128,), dtype=jnp.float32)
    outc = jax.block_until_ready(rmsnorm(xc, wc, eps=eps))
    refc = _reference(xc, wc, eps)
    assert outc.shape == xc.shape and outc.dtype == jnp.float32
    assert jnp.allclose(outc, refc, atol=1e-5, rtol=1e-5)

    # --- Case 4: bf16 x with f32 weight -> PyTorch promotion gives f32 output.
    xd = jax.random.normal(k6, (2, 8, 128), dtype=jnp.float32).astype(jnp.bfloat16)
    wd = jnp.ones((128,), dtype=jnp.float32)
    outd = jax.block_until_ready(rmsnorm(xd, wd, eps=eps))
    refd = _reference(xd, wd, eps)
    assert outd.shape == xd.shape and outd.dtype == jnp.float32
    assert jnp.allclose(outd, refd, atol=2e-2, rtol=2e-2)

    print("KERNEL_OK")
</pallas_src>

<mosaic_0001>
module attributes {stable_mosaic.version = 11 : i64} {
  func.func @_rmsnorm_kernel(%arg0: i32, %arg1: memref<16x32xf32, #tpu.memory_space<vmem>>, %arg2: memref<1x32xf32, #tpu.memory_space<vmem>>, %arg3: memref<16x32xf32, #tpu.memory_space<vmem>>) attributes {dimension_semantics = [#tpu.dimension_semantics<parallel>], iteration_bounds = array<i64: 1>, scalar_prefetch = 0 : i64, scratch_operands = 0 : i64, tpu.core_type = #tpu.core_type<tc>, window_params = [{transform_indices = @transform_0, window_bounds = array<i64: 16, 32>}, {pipeline_mode = #tpu.pipeline_mode<synchronous>, transform_indices = @transform_1, window_bounds = array<i64: 1, 32>}, {transform_indices = @transform_2, window_bounds = array<i64: 16, 32>}]} {
    %c0 = arith.constant 0 : index
    %c0_0 = arith.constant 0 : index
    %0 = vector.load %arg1[%c0, %c0_0] : memref<16x32xf32, #tpu.memory_space<vmem>>, vector<16x32xf32>
    %1 = arith.mulf %0, %0 : vector<16x32xf32>
    %cst = arith.constant dense<0.000000e+00> : vector<16xf32>
    %2 = vector.multi_reduction <add>, %1, %cst [1] : vector<16x32xf32> to vector<16xf32>
    %3 = vector.shape_cast %2 : vector<16xf32> to vector<16x1xf32>
    %cst_1 = arith.constant 3.200000e+01 : f32
    %4 = vector.broadcast %cst_1 : f32 to vector<16x1xf32>
    %5 = arith.divf %3, %4 : vector<16x1xf32>
    %cst_2 = arith.constant 9.99999997E-7 : f32
    %6 = vector.broadcast %cst_2 : f32 to vector<16x1xf32>
    %7 = arith.addf %5, %6 : vector<16x1xf32>
    %8 = math.rsqrt %7 : vector<16x1xf32>
    %9 = vector.broadcast %8 : vector<16x1xf32> to vector<16x32xf32>
    %10 = arith.mulf %0, %9 : vector<16x32xf32>
    %c0_3 = arith.constant 0 : index
    %c0_4 = arith.constant 0 : index
    %11 = vector.load %arg2[%c0_3, %c0_4] : memref<1x32xf32, #tpu.memory_space<vmem>>, vector<1x32xf32>
    %12 = vector.broadcast %11 : vector<1x32xf32> to vector<16x32xf32>
    %13 = arith.mulf %10, %12 : vector<16x32xf32>
    %c0_5 = arith.constant 0 : index
    %c0_6 = arith.constant 0 : index
    %14 = vector.load %arg3[%c0_5, %c0_6] : memref<16x32xf32, #tpu.memory_space<vmem>>, vector<16x32xf32>
    tpu.vector_store %arg3[%c0_5, %c0_6], %13 {strides = array<i32>} : memref<16x32xf32, #tpu.memory_space<vmem>>, vector<16x32xf32>,
    return
  }
  func.func @transform_0(%arg0: i32) -> (i32, i32) {
    %c0_i32 = arith.constant 0 : i32
    %c0_i32_0 = arith.constant 0 : i32
    return %arg0, %c0_i32 : i32, i32
  }
  func.func @transform_1(%arg0: i32) -> (i32, i32) {
    %c0_i32 = arith.constant 0 : i32
    %c0_i32_0 = arith.constant 0 : i32
    %c0_i32_1 = arith.constant 0 : i32
    return %c0_i32, %c0_i32_0 : i32, i32
  }
  func.func @transform_2(%arg0: i32) -> (i32, i32) {
    %c0_i32 = arith.constant 0 : i32
    %c0_i32_0 = arith.constant 0 : i32
    return %arg0, %c0_i32 : i32, i32
  }
}

</mosaic_0001>

<llo_original>
// kernel: tpu_custom_call.1
$region0: #{tpu_custom_call.1}
  #allocation0 [shape = 'u32[]', space=smem, size = 0x4, offset = 0x4, fixed_abs, tag = 'smem constant byte address 0x4 - core index']
  #allocation1 [shape = 'u32[144,128]{1,0:T(1,128)}', space=vmem, size = 0x12000, scoped, tag = 'internal scratch']
  %s0 = inlined_call_operand.hbm [shape: f32[16,32], index: 0, kind: input, shape index: {}]
  %s1 = inlined_call_operand.vmem [shape: f32[1,32], index: 1, kind: input, shape index: {}]
  %s2 = inlined_call_operand.hbm [shape: f32[16,32], index: 2, kind: output, shape index: {}]
  %s3 = sld [smem:[#allocation0]]
  $region22: #{tpu_custom_call.1} parent=0
    _
  %s5 = ssub.s32 1, %s3
  %s6 = scalar_select 0, %s5, %s3
  $region1: #{tpu_custom_call.1} parent=0
    #allocation2 [shape = 'u8[8192]{0}', space=vmem, size = 0x2000, scoped, tag = 'input window, operand 0, single buffered']
    #allocation3 [shape = 's32[1]{0}', space=sflag, size = 0x4, scoped, tag = 'scoped memory for tpu_custom_call.1']
    #allocation4 [shape = 's32[1]{0}', space=sflag, size = 0x4, scoped, tag = 'scoped memory for tpu_custom_call.1']
    #allocation5 [shape = 'u8[8192]{0}', space=vmem, size = 0x2000, scoped, tag = 'output window, operand 0, single buffered']
    %7 = vsyncpa [#allocation3], 0
    %8 = vsyncpa [#allocation4], 0
    // Predicated region
    $region2: #{tpu_custom_call.1} parent=1 // pred_check
      _
    $region3: #{tpu_custom_call.1} parent=1 // pred_check_branch
      %10 = sbr.rel (0) target = $region5
    $region4: #{tpu_custom_call.1} parent=1 // pred_region
      %s12 = ssub.s32 256, 256
      %13 = vsyncadd [#allocation3], %s12
      %s14 = sshll.u32 [#allocation2], 4
      %s15 = int_to_ptr.vmem [resolvable:$true] %s14
      %20 = dma.hbm_to_vmem [thread:$0]  %s0, 256, %s15, [#allocation3], 128, 128, 8
    $region5: #{tpu_custom_call.1} parent=1 // pred_fallthru
      _
    // Predicated region
    $region6: #{tpu_custom_call.1} parent=1 // pred_check
      _
    $region7: #{tpu_custom_call.1} parent=1 // pred_check_branch
      %22 = sbr.rel (0) target = $region9
    $region8: #{tpu_custom_call.1} parent=1 // pred_region
      _
    $region9: #{tpu_custom_call.1} parent=1 // pred_fallthru
      _
    // Predicated region
    $region10: #{tpu_custom_call.1} parent=1 // pred_check
      _
    $region11: #{tpu_custom_call.1} parent=1 // pred_check_branch
      %24 = sbr.rel (0) target = $region13
    $region12: #{tpu_custom_call.1} parent=1 // pred_region
      %25 = dma.done [#allocation3], 256
    $region13: #{tpu_custom_call.1} parent=1 // pred_fallthru
      _
    %v26 = vld [vmem:[#allocation2] sm:$0xff]
    %v27 = vld [vmem:[#allocation2 + $0x8] sm:$0xff]
    %v28 = vmul.f32 %v26, %v26
    %v29 = vmul.f32 %v27, %v27
    %vm30 = vcmask 261120
    %v31 = vsel %vm30, %v28, 0.0
    %32 = vadd.xlane.f32.xlu0 %v31
    %v33 = vpop.xlane.xlu0 %32
    %v34 = vsel %vm30, %v29, 0.0
    %35 = vadd.xlane.f32.xlu0 %v34
    %v36 = vpop.xlane.xlu0 %35
    %v37 = vrcp.pop 32.0
    %v38 = vmul.f32 %v33, %v37
    %v39 = vmul.f32 %v36, %v37
    %v40 = vadd.f32 %v38, 1e-06
    %v41 = vadd.f32 %v39, 1e-06
    %v42 = vrsqrt.pop %v40
    %v43 = vrsqrt.pop %v41
    %v44 = vmul.f32 %v26, %v42
    %v45 = vmul.f32 %v27, %v43
    %v46 = vld [vmem:[%s1] sm:$0x1]
    %v48 = vlaneseq
    %v49 = vshrl.u32 %v48, 7
    %v50 = vsub.s32 0, %v49
    %v51 = vrot.slane %v46, %v50
    %v53 = vmul.f32 %v44, %v51
    %v54 = vmul.f32 %v45, %v51
    %55 = vst.msk [vmem:[#allocation5] sm:$0xff] %vm30, %v53
    %56 = vst.msk [vmem:[#allocation5 + $0x8] sm:$0xff] %vm30, %v54
    // Predicated region
    $region14: #{tpu_custom_call.1} parent=1 // pred_check
      _
    $region15: #{tpu_custom_call.1} parent=1 // pred_check_branch
      %58 = sbr.rel (0) target = $region17
    $region16: #{tpu_custom_call.1} parent=1 // pred_region
      %s60 = ssub.s32 256, 256
      %61 = vsyncadd [#allocation4], %s60
      %s62 = sshll.u32 [#allocation5], 4
      %s63 = int_to_ptr.vmem [resolvable:$true] %s62
      %68 = dma.vmem_to_hbm [thread:$0]  %s63, 256, %s2, [#allocation4], 128, 128, 8
    $region17: #{tpu_custom_call.1} parent=1 // pred_fallthru
      _
    // Predicated region
    $region18: #{tpu_custom_call.1} parent=1 // pred_check
      _
    $region19: #{tpu_custom_call.1} parent=1 // pred_check_branch
      %70 = sbr.rel (0) target = $region21
    $region20: #{tpu_custom_call.1} parent=1 // pred_region
      %71 = dma.done [#allocation4], 256
    $region21: #{tpu_custom_call.1} parent=1 // pred_fallthru
      _
    %72 = vsyncpa [#allocation3], 1
    %73 = vsyncpa [#allocation4], 1

</llo_original>
